<compile_context>
chip_gen: v6e
topology: v6e:2x2x1
jax: 0.10.0
libtpu: 0.0.40
codegen_flags: <defaults>
</compile_context>

<pallas_src>
import functools
import math

import jax
import jax.numpy as jnp
from jax.experimental import pallas as pl
from jax.experimental.pallas import tpu as pltpu


# ----------------------------------------------------------------------------
# Fused kernels: one grid step per batch element.
# ----------------------------------------------------------------------------
def _attention_body(scale, x, w, mask, o_ref):
    """Shared body.  x: (T, D), w: (D, 3D) pre-permuted [Wq|Wk|Wv], mask: (T,T) or None."""
    D = x.shape[-1]

    # One MXU matmul for the whole QKV projection.
    qkv = jnp.dot(x, w, preferred_element_type=jnp.float32)            # (T, 3D)
    q = qkv[:, :D]
    k = qkv[:, D:2 * D]
    v = qkv[:, 2 * D:]

    # Scaled dot-product scores, optional mask, numerically stable softmax.
    s = jnp.dot(q, k.T, preferred_element_type=jnp.float32) * scale    # (T, T)
    if mask is not None:
        s = jnp.where(mask != 0, -jnp.inf, s)
    m = jnp.max(s, axis=-1, keepdims=True)
    p = jnp.exp(s - m)
    p = p / jnp.sum(p, axis=-1, keepdims=True)

    o_ref[...] = jnp.dot(p, v, preferred_element_type=jnp.float32).astype(o_ref.dtype)


def _self_attention_kernel_masked(scale, x_ref, w_ref, mask_ref, o_ref):
    _attention_body(scale, x_ref[...], w_ref[...], mask_ref[...], o_ref)


def _self_attention_kernel_nomask(scale, x_ref, w_ref, o_ref):
    _attention_body(scale, x_ref[...], w_ref[...], None, o_ref)


def self_attention_pallas(x, w_perm, scale, mask_i=None):
    """x: (B, T, D) f32, w_perm: (D, 3D) f32, mask_i: (T, T) int32 or None."""
    B, T, D = x.shape
    x_spec = pl.BlockSpec((None, T, D), lambda b: (b, 0, 0))   # x[b], batch squeezed
    w_spec = pl.BlockSpec((D, 3 * D), lambda b: (0, 0))        # grid-invariant
    out_spec = pl.BlockSpec((None, T, D), lambda b: (b, 0, 0))
    params = pltpu.CompilerParams(dimension_semantics=("parallel",))

    if mask_i is None:
        kernel = functools.partial(_self_attention_kernel_nomask, scale)
        return pl.pallas_call(
            kernel,
            out_shape=jax.ShapeDtypeStruct((B, T, D), jnp.float32),
            grid=(B,),
            in_specs=[x_spec, w_spec],
            out_specs=out_spec,
            compiler_params=params,
        )(x, w_perm)
    else:
        kernel = functools.partial(_self_attention_kernel_masked, scale)
        mask_spec = pl.BlockSpec((T, T), lambda b: (0, 0))     # grid-invariant
        return pl.pallas_call(
            kernel,
            out_shape=jax.ShapeDtypeStruct((B, T, D), jnp.float32),
            grid=(B,),
            in_specs=[x_spec, w_spec, mask_spec],
            out_specs=out_spec,
            compiler_params=params,
        )(x, w_perm, mask_i)


# ----------------------------------------------------------------------------
# Module wrapper matching the PyTorch SelfAttention.
# ----------------------------------------------------------------------------
class SelfAttentionPallas:
    def __init__(self, dim, key=jax.random.PRNGKey(0)):
        self.dim = dim
        self.scale_factor = dim ** (-0.5)
        bound = 1.0 / math.sqrt(dim)   # nn.Linear default init bound (fan_in=dim)
        # Stored as (dim, 3*dim): forward is x @ w  (== x @ weight.T in torch).
        self.w_qkv = jax.random.uniform(key, (dim, 3 * dim), jnp.float32,
                                        -bound, bound)
        # einops 'b t (d k) -> k b t d' with k=3 splits the 3*dim axis with
        # STRIDE 3 (interleaved), not contiguous chunks.  Pre-permute the
        # weight columns ONCE at construction time so the kernel can use
        # contiguous static slices and a single concatenated matmul.
        self.w_perm = jnp.concatenate(
            [self.w_qkv[:, 0::3], self.w_qkv[:, 1::3], self.w_qkv[:, 2::3]],
            axis=1)

    def __call__(self, x, mask=None):
        assert x.ndim == 3, '3D tensor must be provided'
        B, T, D = x.shape
        assert D == self.dim
        if mask is None:
            return self_attention_pallas(x, self.w_perm, self.scale_factor, None)
        assert mask.shape == (T, T)
        mask_i = mask.astype(jnp.int32)
        return self_attention_pallas(x, self.w_perm, self.scale_factor, mask_i)


# ----------------------------------------------------------------------------
# Pure-JAX reference (mirrors the PyTorch forward exactly, incl. the
# interleaved q/k/v split from the einops rearrange).
# ----------------------------------------------------------------------------
def reference_forward(model, x, mask=None):
    qkv = x @ model.w_qkv                              # (B, T, 3D)
    q, k, v = qkv[..., 0::3], qkv[..., 1::3], qkv[..., 2::3]
    s = jnp.einsum('bid,bjd->bij', q, k) * model.scale_factor
    if mask is not None:
        s = jnp.where(mask, -jnp.inf, s)
    a = jax.nn.softmax(s, axis=-1)
    return jnp.einsum('bij,bjd->bid', a, v)


if __name__ == "__main__":
    B, T, dim = 2, 8, 32

    model = SelfAttentionPallas(dim, key=jax.random.PRNGKey(0))

    kx, _ = jax.random.split(jax.random.PRNGKey(0))
    x = jax.random.normal(kx, (B, T, dim), jnp.float32)

    # --- no-mask path ---
    out = jax.block_until_ready(model(x, mask=None))
    ref = reference_forward(model, x, mask=None)
    assert out.shape == (B, T, dim)
    assert jnp.allclose(out, ref, atol=1e-4, rtol=1e-4)

    # --- masked path (causal mask: True = masked/future position) ---
    causal_mask = jnp.triu(jnp.ones((T, T), jnp.bool_), k=1)
    out_m = jax.block_until_ready(model(x, mask=causal_mask))
    ref_m = reference_forward(model, x, mask=causal_mask)
    assert jnp.allclose(out_m, ref_m, atol=1e-4, rtol=1e-4)

    print("KERNEL_OK")
</pallas_src>

<mosaic_0001>
module attributes {stable_mosaic.version = 11 : i64} {
  func.func @_self_attention_kernel_nomask(%arg0: i32, %arg1: memref<1x8x32xf32, #tpu.memory_space<vmem>>, %arg2: memref<32x96xf32, #tpu.memory_space<vmem>>, %arg3: memref<1x8x32xf32, #tpu.memory_space<vmem>>) attributes {dimension_semantics = [#tpu.dimension_semantics<parallel>], iteration_bounds = array<i64: 2>, scalar_prefetch = 0 : i64, scratch_operands = 0 : i64, tpu.core_type = #tpu.core_type<tc>, window_params = [{transform_indices = @transform_0, window_bounds = array<i64: 1, 8, 32>}, {pipeline_mode = #tpu.pipeline_mode<synchronous>, transform_indices = @transform_1, window_bounds = array<i64: 32, 96>}, {transform_indices = @transform_2, window_bounds = array<i64: 1, 8, 32>}]} {
    %c0 = arith.constant 0 : index
    %c0_0 = arith.constant 0 : index
    %c0_1 = arith.constant 0 : index
    %0 = vector.load %arg1[%c0, %c0_0, %c0_1] : memref<1x8x32xf32, #tpu.memory_space<vmem>>, vector<1x8x32xf32>
    %1 = vector.shape_cast %0 : vector<1x8x32xf32> to vector<8x32xf32>
    %c0_2 = arith.constant 0 : index
    %c0_3 = arith.constant 0 : index
    %2 = vector.load %arg2[%c0_2, %c0_3] : memref<32x96xf32, #tpu.memory_space<vmem>>, vector<32x96xf32>
    %cst = arith.constant dense<0.000000e+00> : vector<8x96xf32>
    %3 = tpu.matmul %1, %2, %cst {dimension_numbers = #tpu.dot_dimension_numbers<[1], [0], [0], [1], [0, 0, 1, 1], [], []>} : vector<8x32xf32>, vector<32x96xf32>, vector<8x96xf32> -> vector<8x96xf32>
    %4 = vector.extract_strided_slice %3 {offsets = [0, 0], sizes = [8, 32], strides = [1, 1]} : vector<8x96xf32> to vector<8x32xf32>
    %5 = vector.extract_strided_slice %3 {offsets = [0, 32], sizes = [8, 32], strides = [1, 1]} : vector<8x96xf32> to vector<8x32xf32>
    %6 = vector.extract_strided_slice %3 {offsets = [0, 64], sizes = [8, 32], strides = [1, 1]} : vector<8x96xf32> to vector<8x32xf32>
    %7 = tpu.transpose %5, [1, 0] : vector<8x32xf32> -> vector<32x8xf32>
    %cst_4 = arith.constant dense<0.000000e+00> : vector<8x8xf32>
    %8 = tpu.matmul %4, %7, %cst_4 {dimension_numbers = #tpu.dot_dimension_numbers<[1], [0], [0], [1], [0, 0, 1, 1], [], []>} : vector<8x32xf32>, vector<32x8xf32>, vector<8x8xf32> -> vector<8x8xf32>
    %cst_5 = arith.constant 0.176776692 : f32
    %9 = vector.broadcast %cst_5 : f32 to vector<8x8xf32>
    %10 = arith.mulf %8, %9 : vector<8x8xf32>
    %cst_6 = arith.constant dense<0xFF800000> : vector<8xf32>
    %11 = vector.multi_reduction <maximumf>, %10, %cst_6 [1] : vector<8x8xf32> to vector<8xf32>
    %12 = vector.shape_cast %11 : vector<8xf32> to vector<8x1xf32>
    %13 = vector.broadcast %12 : vector<8x1xf32> to vector<8x8xf32>
    %14 = arith.subf %10, %13 : vector<8x8xf32>
    %15 = math.exp %14 : vector<8x8xf32>
    %cst_7 = arith.constant dense<0.000000e+00> : vector<8xf32>
    %16 = vector.multi_reduction <add>, %15, %cst_7 [1] : vector<8x8xf32> to vector<8xf32>
    %17 = vector.shape_cast %16 : vector<8xf32> to vector<8x1xf32>
    %18 = vector.broadcast %17 : vector<8x1xf32> to vector<8x8xf32>
    %19 = arith.divf %15, %18 : vector<8x8xf32>
    %cst_8 = arith.constant dense<0.000000e+00> : vector<8x32xf32>
    %20 = tpu.matmul %19, %6, %cst_8 {dimension_numbers = #tpu.dot_dimension_numbers<[1], [0], [0], [1], [0, 0, 1, 1], [], []>} : vector<8x8xf32>, vector<8x32xf32>, vector<8x32xf32> -> vector<8x32xf32>
    %c0_9 = arith.constant 0 : index
    %c0_10 = arith.constant 0 : index
    %c0_11 = arith.constant 0 : index
    %21 = vector.load %arg3[%c0_9, %c0_10, %c0_11] : memref<1x8x32xf32, #tpu.memory_space<vmem>>, vector<1x8x32xf32>
    %22 = vector.shape_cast %21 : vector<1x8x32xf32> to vector<8x32xf32>
    %23 = vector.shape_cast %20 : vector<8x32xf32> to vector<1x8x32xf32>
    tpu.vector_store %arg3[%c0_9, %c0_10, %c0_11], %23 {strides = array<i32>} : memref<1x8x32xf32, #tpu.memory_space<vmem>>, vector<1x8x32xf32>,
    return
  }
  func.func @transform_0(%arg0: i32) -> (i32, i32, i32) {
    %c0_i32 = arith.constant 0 : i32
    %c0_i32_0 = arith.constant 0 : i32
    %c0_i32_1 = arith.constant 0 : i32
    return %arg0, %c0_i32, %c0_i32_0 : i32, i32, i32
  }
  func.func @transform_1(%arg0: i32) -> (i32, i32) {
    %c0_i32 = arith.constant 0 : i32
    %c0_i32_0 = arith.constant 0 : i32
    %c0_i32_1 = arith.constant 0 : i32
    return %c0_i32, %c0_i32_0 : i32, i32
  }
  func.func @transform_2(%arg0: i32) -> (i32, i32, i32) {
    %c0_i32 = arith.constant 0 : i32
    %c0_i32_0 = arith.constant 0 : i32
    %c0_i32_1 = arith.constant 0 : i32
    return %arg0, %c0_i32, %c0_i32_0 : i32, i32, i32
  }
}

</mosaic_0001>

<llo_original>
// kernel: tpu_custom_call.1
$region0: #{tpu_custom_call.1}
  #allocation0 [shape = 'u32[]', space=smem, size = 0x4, offset = 0x4, fixed_abs, tag = 'smem constant byte address 0x4 - core index']
  #allocation1 [shape = 'u32[144,128]{1,0:T(1,128)}', space=vmem, size = 0x12000, scoped, tag = 'internal scratch']
  %s0 = inlined_call_operand.hbm [shape: f32[2,8,32], index: 0, kind: input, shape index: {}]
  %s1 = inlined_call_operand.hbm [shape: f32[32,96], index: 1, kind: input, shape index: {}]
  %s2 = inlined_call_operand.hbm [shape: f32[2,8,32], index: 2, kind: output, shape index: {}]
  %s3 = sld [smem:[#allocation0]]
  $region49: #{tpu_custom_call.1} parent=0
    _
  %s5 = ssub.s32 1, %s3
  %s6 = scalar_select 0, %s5, %s3
  $region1: #{tpu_custom_call.1} parent=0
    #allocation2 [shape = 'u8[8192]{0}', space=vmem, size = 0x2000, scoped, tag = 'input window, operand 0']
    #allocation3 [shape = 's32[2]{0}', space=sflag, size = 0x8, scoped, tag = 'scoped memory for tpu_custom_call.1']
    #allocation4 [shape = 's32[2]{0}', space=sflag, size = 0x8, scoped, tag = 'scoped memory for tpu_custom_call.1']
    #allocation5 [shape = 'u8[16384]{0}', space=vmem, size = 0x4000, scoped, tag = 'input window, operand 1, single buffered']
    #allocation6 [shape = 's32[1]{0}', space=sflag, size = 0x4, scoped, tag = 'scoped memory for tpu_custom_call.1']
    #allocation7 [shape = 'u8[8192]{0}', space=vmem, size = 0x2000, scoped, tag = 'output window, operand 0']
    %7 = vsyncpa [#allocation3], 0
    %s8 = scalar_lea.sflag [#allocation3], 1
    %9 = vsyncpa %s8, 0
    %10 = vsyncpa [#allocation6], 0
    %11 = vsyncpa [#allocation4], 0
    %s12 = scalar_lea.sflag [#allocation4], 1
    %13 = vsyncpa %s12, 0
    loop: start=0, step=1, limit=4
    $region2: #{tpu_custom_call.1} parent=1 // loop_pre_header
      _
    $region3: #{tpu_custom_call.1} parent=1 // loop_header
      %s15 = sphi 0, %s19
      %p16 = scmp.ge.s32.totalorder %s15, 4
      %s25 = sphi 0, %s27
      %s28 = sphi 0, %s25
      %s29 = sphi 0, %s28
      %s45 = sphi 0, %s29
      %s49 = sphi 0, %s49
      %s51 = sphi 0, %s49
      %s52 = sphi 0, %s51
      %s66 = sphi 0, %s52
      %s72 = sphi 0, %s74
      %s75 = sphi 0, %s72
      %s76 = sphi 0, %s75
      %s92 = sphi 0, %s76
    $region4: #{tpu_custom_call.1} parent=1 // loop_header_branch
      %18 = sbr.rel (%p16) target = $region8
    $region5: #{tpu_custom_call.1} parent=1 // loop_body
      %s20 = ssub.s32 %s15, 1
      %s21 = ssub.s32 %s15, 2
      %s22 = sadd.s32 %s15, 1
      %s23 = ssub.s32 %s15, %s22
      %p24 = scmp.eq.s32.totalorder %s23, 0
      %s26 = sadd.s32 %s25, 1
      %s27 = scalar_select %p24, %s25, %s26
      %p30 = pneg %p24
      %p31 = scmp.eq.s32.totalorder %s15, 1
      %p32 = por %p30, %p31
      %p33 = scmp.ne.s32.totalorder %s25, %s28
      %p34 = scmp.eq.s32.totalorder %s15, 0
      %p35 = por %p33, %p34
      %p36 = scmp.ne.s32.totalorder %s25, %s28
      %p37 = scmp.eq.s32.totalorder %s20, 1
      %p38 = por %p36, %p37
      %p39 = scmp.ne.s32.totalorder %s28, %s29
      %p40 = scmp.eq.s32.totalorder %s20, 0
      %p41 = por %p39, %p40
      %p42 = scmp.ne.s32.totalorder %s28, %s29
      %p43 = scmp.eq.s32.totalorder %s21, 1
      %p44 = por %p42, %p43
      %p46 = scmp.ne.s32.totalorder %s29, %s45
      %p47 = scmp.eq.s32.totalorder %s21, 0
      %p48 = por %p46, %p47
      %s50 = sadd.s32 %s49, 1
      %p53 = scmp.eq.s32.totalorder %s15, 1
      %p54 = scmp.ne.s32.totalorder %s49, %s51
      %p55 = scmp.eq.s32.totalorder %s15, 0
      %p56 = por %p54, %p55
      %p57 = scmp.ne.s32.totalorder %s49, %s51
      %p58 = scmp.eq.s32.totalorder %s20, 1
      %p59 = por %p57, %p58
      %p60 = scmp.ne.s32.totalorder %s51, %s52
      %p61 = scmp.eq.s32.totalorder %s20, 0
      %p62 = por %p60, %p61
      %p63 = scmp.ne.s32.totalorder %s51, %s52
      %p64 = scmp.eq.s32.totalorder %s21, 1
      %p65 = por %p63, %p64
      %p67 = scmp.ne.s32.totalorder %s52, %s66
      %p68 = scmp.eq.s32.totalorder %s21, 0
      %p69 = por %p67, %p68
      %s70 = ssub.s32 %s15, %s22
      %p71 = scmp.eq.s32.totalorder %s70, 0
      %s73 = sadd.s32 %s72, 1
      %s74 = scalar_select %p71, %s72, %s73
      %p77 = pneg %p71
      %p78 = scmp.eq.s32.totalorder %s15, 1
      %p79 = por %p77, %p78
      %p80 = scmp.ne.s32.totalorder %s72, %s75
      %p81 = scmp.eq.s32.totalorder %s15, 0
      %p82 = por %p80, %p81
      %p83 = scmp.ne.s32.totalorder %s72, %s75
      %p84 = scmp.eq.s32.totalorder %s20, 1
      %p85 = por %p83, %p84
      %p86 = scmp.ne.s32.totalorder %s75, %s76
      %p87 = scmp.eq.s32.totalorder %s20, 0
      %p88 = por %p86, %p87
      %p89 = scmp.ne.s32.totalorder %s75, %s76
      %p90 = scmp.eq.s32.totalorder %s21, 1
      %p91 = por %p89, %p90
      %p93 = scmp.ne.s32.totalorder %s76, %s92
      %p94 = scmp.eq.s32.totalorder %s21, 0
      %p95 = por %p93, %p94
      %p96 = scmp.le.s32.totalorder 1, %s15
      %p97 = scmp.lt.s32.totalorder %s15, 3
      %p98 = pnand %p96, %p97
      %p99 = pneg %p98
      // Predicated region
      $region9: #{tpu_custom_call.1} parent=5 // pred_check
        _
      $region10: #{tpu_custom_call.1} parent=5 // pred_check_branch
        %101 = sbr.rel (%p98) target = $region12
      $region11: #{tpu_custom_call.1} parent=5 // pred_region
        %s102 = ssub.s32 %s15, 1
        // Predicated region
        $region13: #{tpu_custom_call.1} parent=11 // pred_check
          %p103 = pneg %p62
        $region14: #{tpu_custom_call.1} parent=11 // pred_check_branch
          %105 = sbr.rel (%p103) target = $region16
        $region15: #{tpu_custom_call.1} parent=11 // pred_region
          %s107 = ssub.s32 512, 512
          %108 = vsyncadd [#allocation6], %s107
          %s109 = sshll.u32 [#allocation5], 4
          %s110 = int_to_ptr.vmem [resolvable:$true] %s109
          %115 = dma.hbm_to_vmem [thread:$0]  %s1, 512, %s110, [#allocation6], 128, 128, 8
        $region16: #{tpu_custom_call.1} parent=11 // pred_fallthru
          _
      $region12: #{tpu_custom_call.1} parent=5 // pred_fallthru
        _
      %p116 = scmp.lt.s32.totalorder %s15, 2
      // Predicated region
      $region17: #{tpu_custom_call.1} parent=5 // pred_check
        %p117 = pneg %p116
      $region18: #{tpu_custom_call.1} parent=5 // pred_check_branch
        %119 = sbr.rel (%p117) target = $region20
      $region19: #{tpu_custom_call.1} parent=5 // pred_region
        // Predicated region
        $region21: #{tpu_custom_call.1} parent=19 // pred_check
          %p120 = pneg %p35
        $region22: #{tpu_custom_call.1} parent=19 // pred_check_branch
          %122 = sbr.rel (%p120) target = $region24
        $region23: #{tpu_custom_call.1} parent=19 // pred_region
          %s123 = sand.u32 %s25, 1
          %s124 = scalar_lea.sflag [#allocation3], %s123
          %s125 = sand.u32 %s25, 1
          %s126 = smul.addr %s125, 8
          %s127 = scalar_lea.vmem [#allocation2], %s126
          %s129 = ssub.s32 128, 128
          %130 = vsyncadd %s124, %s129
          %s131 = smul.addr %s15, 128
          %s132 = scalar_lea.hbm %s0, %s131
          %s134 = sshll.u32 %s127, 4
          %s135 = int_to_ptr.vmem [resolvable:$true] %s134
          %137 = dma.hbm_to_vmem [thread:$0]  %s132, 128, %s135, %s124
        $region24: #{tpu_custom_call.1} parent=19 // pred_fallthru
          _
      $region20: #{tpu_custom_call.1} parent=5 // pred_fallthru
        _
      %p138 = scmp.le.s32.totalorder 1, %s15
      %p139 = scmp.lt.s32.totalorder %s15, 3
      %p140 = pnand %p138, %p139
      %p141 = pneg %p140
      // Predicated region
      $region25: #{tpu_custom_call.1} parent=5 // pred_check
        _
      $region26: #{tpu_custom_call.1} parent=5 // pred_check_branch
        %143 = sbr.rel (%p140) target = $region28
      $region27: #{tpu_custom_call.1} parent=5 // pred_region
        %s144 = ssub.s32 %s15, 1
        %s145 = sand.u32 %s28, 1
        %s146 = scalar_lea.sflag [#allocation3], %s145
        %s147 = sand.u32 %s28, 1
        %s148 = smul.addr %s147, 8
        %s149 = scalar_lea.vmem [#allocation2], %s148
        // Predicated region
        $region29: #{tpu_custom_call.1} parent=27 // pred_check
          %p150 = pneg %p41
        $region30: #{tpu_custom_call.1} parent=27 // pred_check_branch
          %152 = sbr.rel (%p150) target = $region32
        $region31: #{tpu_custom_call.1} parent=27 // pred_region
          %153 = dma.done %s146, 128
        $region32: #{tpu_custom_call.1} parent=27 // pred_fallthru
          _
        // Predicated region
        $region33: #{tpu_custom_call.1} parent=27 // pred_check
          %p154 = pneg %p62
        $region34: #{tpu_custom_call.1} parent=27 // pred_check_branch
          %156 = sbr.rel (%p154) target = $region36
        $region35: #{tpu_custom_call.1} parent=27 // pred_region
          %157 = dma.done [#allocation6], 512
        $region36: #{tpu_custom_call.1} parent=27 // pred_fallthru
          _
        %s158 = sand.u32 %s28, 1
        %s159 = scalar_lea.sflag [#allocation3], %s158
        %s160 = sand.u32 %s28, 1
        %s161 = smul.addr %s160, 8
        %s162 = scalar_lea.vmem [#allocation2], %s161
        %p163 = pneg %p41
        %p164 = pneg %p38
        %p165 = pneg %p62
        %p166 = pneg %p59
        %p167 = pneg %p88
        %p168 = pneg %p85
        %s169 = sand.u32 %s75, 1
        %s170 = scalar_lea.sflag [#allocation4], %s169
        %s171 = sand.u32 %s75, 1
        %s172 = smul.addr %s171, 8
        %s173 = scalar_lea.vmem [#allocation7], %s172
        %v174 = vld [vmem:[%s149] sm:$0xff]
        %v175 = vld [vmem:[#allocation5] sm:$0xff]
        %v176 = vld [vmem:[#allocation5 + $0x8] sm:$0xff]
        %v177 = vld [vmem:[#allocation5 + $0x10] sm:$0xff]
        %v178 = vld [vmem:[#allocation5 + $0x18] sm:$0xff]
        %vm179 = vcmask 261120
        %v181 = vsel %vm179, %v174, 0
        %183 = vmatprep.subr.mxu0 0.0
        %184 = vmatpush1.msra.mxu0 0.0
        %185 = vmatprep.subr.mxu0 0.0
        %186 = vmatpush1.msra.mxu0 0.0
        %187 = vmatprep.subr.mxu0 0.0
        %188 = vmatpush1.msra.mxu0 0.0
        %189 = vmatprep.subr.mxu0 0.0
        %190 = vmatpush1.msra.mxu0 0.0
        %191 = vmatprep.subr.mxu0 0.0
        %192 = vmatpush1.msra.mxu0 0.0
        %193 = vmatprep.subr.mxu0 0.0
        %194 = vmatpush1.msra.mxu0 0.0
        %195 = vmatprep.subr.mxu0 0.0
        %196 = vmatpush1.msra.mxu0 0.0
        %197 = vmatprep.subr.mxu0 0.0
        %198 = vmatpush1.msra.mxu0 0.0
        %199 = vmatprep.subr.mxu0 0.0
        %200 = vmatpush1.msra.mxu0 0.0
        %201 = vmatprep.subr.mxu0 0.0
        %202 = vmatpush1.msra.mxu0 0.0
        %203 = vmatprep.subr.mxu0 0.0
        %204 = vmatpush1.msra.mxu0 0.0
        %205 = vmatprep.subr.mxu0 0.0
        %206 = vmatpush1.msra.mxu0 0.0
        %207 = vmatprep.subr.mxu0 0.0
        %208 = vmatpush1.msra.mxu0 %v178
        %209 = vmatprep.subr.mxu0 0.0
        %210 = vmatpush1.msra.mxu0 %v177
        %211 = vmatprep.subr.mxu0 0.0
        %212 = vmatpush1.msra.mxu0 %v176
        %213 = vmatprep.subr.mxu0 0.0
        %214 = vmatpush1.msra.mxu0 %v175
        %215 = vmatprep.subr.mxu0 0.0
        %216 = vmatpush2.msra.mxu0 0.0
        %217 = vmatprep.subr.mxu0 0.0
        %218 = vmatpush2.msra.mxu0 0.0
        %219 = vmatprep.subr.mxu0 0.0
        %220 = vmatpush2.msra.mxu0 0.0
        %221 = vmatprep.subr.mxu0 0.0
        %222 = vmatpush2.msra.mxu0 0.0
        %223 = vmatprep.subr.mxu0 0.0
        %224 = vmatpush2.msra.mxu0 0.0
        %225 = vmatprep.subr.mxu0 0.0
        %226 = vmatpush2.msra.mxu0 0.0
        %227 = vmatprep.subr.mxu0 0.0
        %228 = vmatpush2.msra.mxu0 0.0
        %229 = vmatprep.subr.mxu0 0.0
        %230 = vmatpush2.msra.mxu0 0.0
        %231 = vmatprep.subr.mxu0 0.0
        %232 = vmatpush2.msra.mxu0 0.0
        %233 = vmatprep.subr.mxu0 0.0
        %234 = vmatpush2.msra.mxu0 0.0
        %235 = vmatprep.subr.mxu0 0.0
        %236 = vmatpush2.msra.mxu0 0.0
        %237 = vmatprep.subr.mxu0 0.0
        %238 = vmatpush2.msra.mxu0 0.0
        %239 = vmatprep.subr.mxu0 0.0
        %240 = vmatpush2.msra.mxu0 0.0
        %241 = vmatprep.subr.mxu0 0.0
        %242 = vmatpush2.msra.mxu0 0.0
        %243 = vmatprep.subr.mxu0 0.0
        %244 = vmatpush2.msra.mxu0 0.0
        %245 = vmatprep.subr.mxu0 0.0
        %246 = vmatpush2.msra.mxu0 0.0
        %247 = vmatprep.mubr.f32.mxu0 0.0
        %248 = vmatmul.mubr.f32.gmra.mxu0 %v181
        %v249 = vpop.f32.mrf.mxu0
        %v250 = vadd.f32 0.0, %v249
        %v251 = vpop.f32.mrf.mxu0
        %252 = vdwg.mxu0
        %254 = vrot.lane.b32.xlu0 %v250, 96
        %v255 = vpop.permute.xlu0 %254
        %v256 = vsel %vm179, %v250, 0
        %v258 = vsel %vm179, %v255, 0
        %260 = vmatprep.subr.mxu0 0.0
        %261 = vmatpush1.xpose.msra.mxu0 0.0
        %262 = vmatprep.subr.mxu0 0.0
        %263 = vmatpush1.xpose.msra.mxu0 0.0
        %264 = vmatprep.subr.mxu0 0.0
        %265 = vmatpush1.xpose.msra.mxu0 0.0
        %266 = vmatprep.subr.mxu0 0.0
        %267 = vmatpush1.xpose.msra.mxu0 0.0
        %268 = vmatprep.subr.mxu0 0.0
        %269 = vmatpush1.xpose.msra.mxu0 0.0
        %270 = vmatprep.subr.mxu0 0.0
        %271 = vmatpush1.xpose.msra.mxu0 0.0
        %272 = vmatprep.subr.mxu0 0.0
        %273 = vmatpush1.xpose.msra.mxu0 0.0
        %274 = vmatprep.subr.mxu0 0.0
        %275 = vmatpush1.xpose.msra.mxu0 0.0
        %276 = vmatprep.subr.mxu0 0.0
        %277 = vmatpush1.xpose.msra.mxu0 0.0
        %278 = vmatprep.subr.mxu0 0.0
        %279 = vmatpush1.xpose.msra.mxu0 0.0
        %280 = vmatprep.subr.mxu0 0.0
        %281 = vmatpush1.xpose.msra.mxu0 0.0
        %282 = vmatprep.subr.mxu0 0.0
        %283 = vmatpush1.xpose.msra.mxu0 0.0
        %284 = vmatprep.subr.mxu0 0.0
        %285 = vmatpush1.xpose.msra.mxu0 0.0
        %286 = vmatprep.subr.mxu0 0.0
        %287 = vmatpush1.xpose.msra.mxu0 0.0
        %288 = vmatprep.subr.mxu0 0.0
        %289 = vmatpush1.xpose.msra.mxu0 0.0
        %290 = vmatprep.subr.mxu0 0.0
        %291 = vmatpush1.xpose.msra.mxu0 %v258
        %292 = vmatprep.subr.mxu0 0.0
        %293 = vmatpush2.xpose.msra.mxu0 0.0
        %294 = vmatprep.subr.mxu0 0.0
        %295 = vmatpush2.xpose.msra.mxu0 0.0
        %296 = vmatprep.subr.mxu0 0.0
        %297 = vmatpush2.xpose.msra.mxu0 0.0
        %298 = vmatprep.subr.mxu0 0.0
        %299 = vmatpush2.xpose.msra.mxu0 0.0
        %300 = vmatprep.subr.mxu0 0.0
        %301 = vmatpush2.xpose.msra.mxu0 0.0
        %302 = vmatprep.subr.mxu0 0.0
        %303 = vmatpush2.xpose.msra.mxu0 0.0
        %304 = vmatprep.subr.mxu0 0.0
        %305 = vmatpush2.xpose.msra.mxu0 0.0
        %306 = vmatprep.subr.mxu0 0.0
        %307 = vmatpush2.xpose.msra.mxu0 0.0
        %308 = vmatprep.subr.mxu0 0.0
        %309 = vmatpush2.xpose.msra.mxu0 0.0
        %310 = vmatprep.subr.mxu0 0.0
        %311 = vmatpush2.xpose.msra.mxu0 0.0
        %312 = vmatprep.subr.mxu0 0.0
        %313 = vmatpush2.xpose.msra.mxu0 0.0
        %314 = vmatprep.subr.mxu0 0.0
        %315 = vmatpush2.xpose.msra.mxu0 0.0
        %316 = vmatprep.subr.mxu0 0.0
        %317 = vmatpush2.xpose.msra.mxu0 0.0
        %318 = vmatprep.subr.mxu0 0.0
        %319 = vmatpush2.xpose.msra.mxu0 0.0
        %320 = vmatprep.subr.mxu0 0.0
        %321 = vmatpush2.xpose.msra.mxu0 0.0
        %322 = vmatprep.subr.mxu0 0.0
        %323 = vmatpush2.xpose.msra.mxu0 0.0
        %324 = vmatprep.mubr.f32.mxu0 0.0
        %325 = vmatmul.mubr.f32.gmra.mxu0 %v256
        %v326 = vpop.f32.mrf.mxu0
        %v327 = vadd.f32 0.0, %v326
        %v328 = vpop.f32.mrf.mxu0
        %329 = vdwg.mxu0
        %v330 = vmul.f32 %v327, 0.17677669
        %vm331 = vcmask 64512
        %v332 = vsel %vm331, %v330, -inf
        %333 = vmax.xlane.f32.xlu0 %v332
        %v334 = vpop.xlane.xlu0 %333
        %v335 = vsub.f32 %v330, %v334
        %v336 = vmul.f32 %v335, 1.442695
        %v337 = vpow.pop %v336
        %v338 = vsel %vm331, %v337, 0.0
        %339 = vadd.xlane.f32.xlu0 %v338
        %v340 = vpop.xlane.xlu0 %339
        %v341 = vrcp.pop %v340
        %v342 = vmul.f32 %v337, %v341
        %343 = vrot.lane.b32.xlu0 %v250, 64
        %v344 = vpop.permute.xlu0 %343
        %v347 = vsel %vm331, %v342, 0
        %349 = vmatprep.subr.mxu0 0.0
        %350 = vmatpush1.msra.mxu0 0.0
        %351 = vmatprep.subr.mxu0 0.0
        %352 = vmatpush1.msra.mxu0 0.0
        %353 = vmatprep.subr.mxu0 0.0
        %354 = vmatpush1.msra.mxu0 0.0
        %355 = vmatprep.subr.mxu0 0.0
        %356 = vmatpush1.msra.mxu0 0.0
        %357 = vmatprep.subr.mxu0 0.0
        %358 = vmatpush1.msra.mxu0 0.0
        %359 = vmatprep.subr.mxu0 0.0
        %360 = vmatpush1.msra.mxu0 0.0
        %361 = vmatprep.subr.mxu0 0.0
        %362 = vmatpush1.msra.mxu0 0.0
        %363 = vmatprep.subr.mxu0 0.0
        %364 = vmatpush1.msra.mxu0 0.0
        %365 = vmatprep.subr.mxu0 0.0
        %366 = vmatpush1.msra.mxu0 0.0
        %367 = vmatprep.subr.mxu0 0.0
        %368 = vmatpush1.msra.mxu0 0.0
        %369 = vmatprep.subr.mxu0 0.0
        %370 = vmatpush1.msra.mxu0 0.0
        %371 = vmatprep.subr.mxu0 0.0
        %372 = vmatpush1.msra.mxu0 0.0
        %373 = vmatprep.subr.mxu0 0.0
        %374 = vmatpush1.msra.mxu0 0.0
        %375 = vmatprep.subr.mxu0 0.0
        %376 = vmatpush1.msra.mxu0 0.0
        %377 = vmatprep.subr.mxu0 0.0
        %378 = vmatpush1.msra.mxu0 0.0
        %379 = vmatprep.subr.mxu0 0.0
        %380 = vmatpush1.msra.mxu0 %v344
        %381 = vmatprep.subr.mxu0 0.0
        %382 = vmatpush2.msra.mxu0 0.0
        %383 = vmatprep.subr.mxu0 0.0
        %384 = vmatpush2.msra.mxu0 0.0
        %385 = vmatprep.subr.mxu0 0.0
        %386 = vmatpush2.msra.mxu0 0.0
        %387 = vmatprep.subr.mxu0 0.0
        %388 = vmatpush2.msra.mxu0 0.0
        %389 = vmatprep.subr.mxu0 0.0
        %390 = vmatpush2.msra.mxu0 0.0
        %391 = vmatprep.subr.mxu0 0.0
        %392 = vmatpush2.msra.mxu0 0.0
        %393 = vmatprep.subr.mxu0 0.0
        %394 = vmatpush2.msra.mxu0 0.0
        %395 = vmatprep.subr.mxu0 0.0
        %396 = vmatpush2.msra.mxu0 0.0
        %397 = vmatprep.subr.mxu0 0.0
        %398 = vmatpush2.msra.mxu0 0.0
        %399 = vmatprep.subr.mxu0 0.0
        %400 = vmatpush2.msra.mxu0 0.0
        %401 = vmatprep.subr.mxu0 0.0
        %402 = vmatpush2.msra.mxu0 0.0
        %403 = vmatprep.subr.mxu0 0.0
        %404 = vmatpush2.msra.mxu0 0.0
        %405 = vmatprep.subr.mxu0 0.0
        %406 = vmatpush2.msra.mxu0 0.0
        %407 = vmatprep.subr.mxu0 0.0
        %408 = vmatpush2.msra.mxu0 0.0
        %409 = vmatprep.subr.mxu0 0.0
        %410 = vmatpush2.msra.mxu0 0.0
        %411 = vmatprep.subr.mxu0 0.0
        %412 = vmatpush2.msra.mxu0 0.0
        %413 = vmatprep.mubr.f32.mxu0 0.0
        %414 = vmatmul.mubr.f32.gmra.mxu0 %v347
        %v415 = vpop.f32.mrf.mxu0
        %v416 = vadd.f32 0.0, %v415
        %v417 = vpop.f32.mrf.mxu0
        %418 = vdwg.mxu0
        %419 = vst.msk [vmem:[%s173] sm:$0xff] %vm179, %v416
        %s420 = sand.u32 %s75, 1
        %s421 = scalar_lea.sflag [#allocation4], %s420
        %s422 = sand.u32 %s75, 1
        %s423 = smul.addr %s422, 8
        %s424 = scalar_lea.vmem [#allocation7], %s423
        // Predicated region
        $region37: #{tpu_custom_call.1} parent=27 // pred_check
          %p425 = pneg %p85
        $region38: #{tpu_custom_call.1} parent=27 // pred_check_branch
          %427 = sbr.rel (%p425) target = $region40
        $region39: #{tpu_custom_call.1} parent=27 // pred_region
          %s429 = ssub.s32 128, 128
          %430 = vsyncadd %s421, %s429
          %s431 = smul.addr %s20, 128
          %s432 = scalar_lea.hbm %s2, %s431
          %s434 = sshll.u32 %s424, 4
          %s435 = int_to_ptr.vmem [resolvable:$true] %s434
          %437 = dma.vmem_to_hbm [thread:$0]  %s435, 128, %s432, %s421
        $region40: #{tpu_custom_call.1} parent=27 // pred_fallthru
          _
      $region28: #{tpu_custom_call.1} parent=5 // pred_fallthru
        _
      %p438 = scmp.le.s32.totalorder 2, %s15
      // Predicated region
      $region41: #{tpu_custom_call.1} parent=5 // pred_check
        %p439 = pneg %p438
      $region42: #{tpu_custom_call.1} parent=5 // pred_check_branch
        %441 = sbr.rel (%p439) target = $region44
      $region43: #{tpu_custom_call.1} parent=5 // pred_region
        %s442 = ssub.s32 %s15, 2
        // Predicated region
        $region45: #{tpu_custom_call.1} parent=43 // pred_check
          %p443 = pneg %p91
        $region46: #{tpu_custom_call.1} parent=43 // pred_check_branch
          %445 = sbr.rel (%p443) target = $region48
        $region47: #{tpu_custom_call.1} parent=43 // pred_region
          %s446 = sand.u32 %s76, 1
          %s447 = scalar_lea.sflag [#allocation4], %s446
          %s448 = sand.u32 %s76, 1
          %s449 = smul.addr %s448, 8
          %s450 = scalar_lea.vmem [#allocation7], %s449
          %451 = dma.done %s447, 128
        $region48: #{tpu_custom_call.1} parent=43 // pred_fallthru
          _
      $region44: #{tpu_custom_call.1} parent=5 // pred_fallthru
        _
    $region6: #{tpu_custom_call.1} parent=1 // loop_footer
      %s19 = sadd.s32 1, %s15
    $region7: #{tpu_custom_call.1} parent=1 // loop_footer_branch
      %14 = sbr.rel target = $region3
    $region8: #{tpu_custom_call.1} parent=1 // loop_exit
      _
    %452 = vsyncpa [#allocation3], 1
    %s453 = scalar_lea.sflag [#allocation3], 1
    %454 = vsyncpa %s453, 1
    %455 = vsyncpa [#allocation6], 1
    %456 = vsyncpa [#allocation4], 1
    %s457 = scalar_lea.sflag [#allocation4], 1
    %458 = vsyncpa %s457, 1

</llo_original>
